<compile_context>
chip_gen: v7x
topology: tpu7x:2x2x1
jax: 0.10.0
libtpu: 0.0.40
codegen_flags: <defaults>
</compile_context>

<pallas_src>
import functools
import math

import jax
import jax.numpy as jnp
import numpy as np
from jax import lax
from jax.experimental import pallas as pl
from jax.experimental.pallas import tpu as pltpu


def _mha_enc_kernel(xf_ref, xq_ref, w_ref, o_ref, k_scr, v_scr,
                    *, dk, dpad, num_q_tiles):
    Bt, Lf, Ep = xf_ref.shape
    _, Lq, _ = xq_ref.shape
    li = pl.program_id(1)

    w = w_ref[...]                  # (3*Dp, Ep), bf16, PyTorch (out, in) orientation
    wq = w[:dpad, :]                # (Dp, Ep)
    wkv = w[dpad:, :]               # (2*Dp, Ep)

    # K/V projection of the full sequence: computed once per batch block (query-tile
    # 0) and cached in VMEM scratch across the "arbitrary" query-tile grid axis.
    @pl.when(li == 0)
    def _():
        xf2d = xf_ref[...].astype(jnp.bfloat16).reshape(Bt * Lf, Ep)
        kvp = lax.dot_general(
            xf2d, wkv,
            dimension_numbers=(((1,), (1,)), ((), ())),   # contract on E (trans_b)
            preferred_element_type=jnp.float32,
        )                                                 # (Bt*Lf, 2*Dp)
        k_scr[...] = kvp[:, :dpad].reshape(Bt, Lf, dpad).astype(jnp.bfloat16)
        v_scr[...] = kvp[:, dpad:].reshape(Bt, Lf, dpad).astype(jnp.bfloat16)

    # Q projection for this query tile (bf16 MXU feed, f32 accumulation).
    xq2d = xq_ref[...].astype(jnp.bfloat16).reshape(Bt * Lq, Ep)
    q = lax.dot_general(
        xq2d, wq,
        dimension_numbers=(((1,), (1,)), ((), ())),
        preferred_element_type=jnp.float32,
    ).reshape(Bt, Lq, dpad).astype(jnp.bfloat16)

    k = k_scr[...]
    v = v_scr[...]

    # energy tile = Q @ K^T (contract last dims; no materialized k.T).
    energy = jnp.einsum("bqd,bkd->bqk", q, k, preferred_element_type=jnp.float32)

    # PyTorch semantics: per batch element, length = #nonzero entries of the FIRST
    # row of energy; columns with index >= length are set to -inf.
    if num_q_tiles == 1:
        e_row0 = energy
    else:
        # Recompute the first 8 query rows (full sublane) so every tile sees row 0.
        x0 = xf_ref[:, 0:8, :].astype(jnp.bfloat16).reshape(Bt * 8, Ep)
        q0 = lax.dot_general(
            x0, wq,
            dimension_numbers=(((1,), (1,)), ((), ())),
            preferred_element_type=jnp.float32,
        ).reshape(Bt, 8, dpad).astype(jnp.bfloat16)
        e_row0 = jnp.einsum("bqd,bkd->bqk", q0, k, preferred_element_type=jnp.float32)
    lengths = jnp.sum((e_row0[:, 0:1, :] != 0.0).astype(jnp.int32),
                      axis=-1, keepdims=True)             # (Bt, 1, 1)
    col = lax.broadcasted_iota(jnp.int32, energy.shape, 2)
    energy = jnp.where(col >= lengths, -jnp.inf, energy)

    # softmax(energy / sqrt(dk), axis=-1) in f32; approx reciprocal -> EUP slot.
    scaled = energy * (1.0 / math.sqrt(dk))
    m = jnp.max(scaled, axis=-1, keepdims=True)
    e = jnp.exp(scaled - m)
    denom = jnp.sum(e, axis=-1, keepdims=True)
    score = e * pl.reciprocal(denom, approx=True)

    out = jnp.einsum("bqk,bkd->bqd", score.astype(jnp.bfloat16), v,
                     preferred_element_type=jnp.float32)
    o_ref[...] = out.astype(o_ref.dtype)


def _tensorcores_per_chip():
    """2 TensorCores only on v7x; v5e/v6e are single-TC (batch split is pure loss)."""
    try:
        kind = jax.devices()[0].device_kind.lower()
    except Exception:
        return 1
    return 2 if ("v7" in kind or "7x" in kind) else 1


def _pick_query_tile(lp):
    """Largest multiple-of-8 divisor of lp not exceeding 256 (one tile if lp <= 256)."""
    target = 256
    if lp <= target:
        return lp
    for cand in range(target, 7, -8):
        if lp % cand == 0:
            return cand
    return lp


def multihead_enc(x, wq, wk, wv, dk):
    """x: (B, L, E); wq/wk/wv: (D, E) PyTorch-style nn.Linear weights (bias=False)."""
    B, L, E = x.shape
    D = wq.shape[0]
    out_dtype = x.dtype

    # Lane/sublane padding (all zero-pads; exact no-ops for the math and the mask).
    Dp = ((D + 127) // 128) * 128     # head dim -> lane-dense slices / output
    Ep = ((E + 127) // 128) * 128     # contraction dim -> full-lane x / weight loads
    Lp = ((L + 7) // 8) * 8           # sequence -> free reshapes, full MXU sublanes

    x_p = jnp.pad(x, ((0, 0), (0, Lp - L), (0, Ep - E))).astype(jnp.bfloat16)

    def _pad_w(w):                    # (D, E) -> (Dp, Ep); zero rows/cols are inert
        return jnp.pad(w, ((0, Dp - D), (0, Ep - E)))

    # One fused bf16 weight operand (normally done once at parameter-init time).
    wqkv = jnp.concatenate([_pad_w(wq), _pad_w(wk), _pad_w(wv)],
                           axis=0).astype(jnp.bfloat16)        # (3*Dp, Ep)

    # Batch split across TensorCores only where there are 2 of them (v7x).
    nb = 2 if (_tensorcores_per_chip() >= 2 and B >= 2 and B % 2 == 0) else 1
    Bt = B // nb

    Lq = _pick_query_tile(Lp)
    n_lq = Lp // Lq

    # Explicit VMEM budget from the actual block + intermediate footprint (2x headroom).
    block_bytes = (
        2 * Bt * Lp * Ep * 2          # full-sequence x block (double-buffered, bf16)
        + 2 * Bt * Lq * Ep * 2        # query-tile x block
        + 2 * 3 * Dp * Ep * 2         # fused weights
        + 2 * Bt * Lq * Dp * 4        # output tile (f32)
        + 2 * Bt * Lp * Dp * 2        # K/V scratch (bf16)
    )
    inter_bytes = (
        Bt * Lp * 2 * Dp * 4          # K/V projection accumulator
        + Bt * Lq * Dp * 6            # Q tile (f32 + bf16)
        + 4 * Bt * Lq * Lp * 4        # energy / masked / exp / score temporaries
    )
    vmem_limit = int(min(max(2 * (block_bytes + inter_bytes), 32 * 1024 * 1024),
                         64 * 1024 * 1024))

    flops = int(
        2 * B * Lp * Ep * 2 * Dp      # K/V projection (once per batch element)
        + 2 * B * Lp * Ep * Dp        # Q projection
        + 2 * B * Lp * Lp * Dp        # Q @ K^T
        + 2 * B * Lp * Lp * Dp        # score @ V
    )
    transcendentals = int(B * Lp * Lp + B * Lp)
    bytes_accessed = int(2 * B * Lp * Ep * 2 + 3 * Dp * Ep * 2 + B * Lp * Dp * 4)

    kernel = functools.partial(_mha_enc_kernel, dk=dk, dpad=Dp, num_q_tiles=n_lq)
    out_padded = pl.pallas_call(
        kernel,
        out_shape=jax.ShapeDtypeStruct((B, Lp, Dp), out_dtype),
        grid=(nb, n_lq),
        in_specs=[
            pl.BlockSpec((Bt, Lp, Ep), lambda b, l: (b, 0, 0)),   # full seq (K/V, row 0)
            pl.BlockSpec((Bt, Lq, Ep), lambda b, l: (b, l, 0)),   # query tile
            pl.BlockSpec((3 * Dp, Ep), lambda b, l: (0, 0)),      # fused weights
        ],
        out_specs=pl.BlockSpec((Bt, Lq, Dp), lambda b, l: (b, l, 0)),
        scratch_shapes=[
            pltpu.VMEM((Bt, Lp, Dp), jnp.bfloat16),               # K cache
            pltpu.VMEM((Bt, Lp, Dp), jnp.bfloat16),               # V cache
        ],
        compiler_params=pltpu.CompilerParams(
            dimension_semantics=("parallel", "arbitrary"),
            vmem_limit_bytes=vmem_limit,
        ),
        cost_estimate=pl.CostEstimate(
            flops=flops,
            transcendentals=transcendentals,
            bytes_accessed=bytes_accessed,
        ),
    )(x_p, x_p, wqkv)

    # TODO(synk): drop this slice (extra HBM round-trip) if the consumer can read the
    # padded (B, Lp, Dp) layout or fuse it into the next op.
    return out_padded[:, :L, :D]


def _reference(x, wq, wk, wv, dk):
    """Pure-JAX f32 replica of the PyTorch forward for verification."""
    q = jnp.einsum("ble,de->bld", x, wq)
    k = jnp.einsum("ble,de->bld", x, wk)
    v = jnp.einsum("ble,de->bld", x, wv)
    energy = jnp.einsum("bld,bmd->blm", q, k)
    B, L, _ = energy.shape
    length = jnp.sum(energy[:, 0, :] != 0.0, axis=-1)     # (B,)
    col = jnp.arange(L)
    mask = col[None, None, :] >= length[:, None, None]
    energy = jnp.where(mask, -jnp.inf, energy)
    score = jax.nn.softmax(energy / math.sqrt(dk), axis=-1)
    return jnp.einsum("blm,bmd->bld", score, v)


if __name__ == "__main__":
    # Module hyper-parameters (small, consistent with the forward pass)
    embedding_dim = 32
    dk = 8
    num_heads = 4
    D = dk * num_heads  # 32

    B, L = 2, 8

    key = jax.random.PRNGKey(0)
    k_x, k_q, k_k, k_v = jax.random.split(key, 4)

    x = jax.random.normal(k_x, (B, L, embedding_dim), dtype=jnp.float32)
    # Zero-pad the tail of the second sequence so the data-dependent mask path
    # (length < L) is exercised: zero x rows -> zero K rows -> zero energy cols.
    x = x.at[1, L - 2:, :].set(0.0)

    scale = 1.0 / math.sqrt(embedding_dim)
    wq = jax.random.normal(k_q, (D, embedding_dim), dtype=jnp.float32) * scale
    wk = jax.random.normal(k_k, (D, embedding_dim), dtype=jnp.float32) * scale
    wv = jax.random.normal(k_v, (D, embedding_dim), dtype=jnp.float32) * scale

    out = jax.block_until_ready(multihead_enc(x, wq, wk, wv, dk))
    ref = jax.block_until_ready(_reference(x, wq, wk, wv, dk))

    # Kernel uses bf16 MXU feeds (f32 accumulation); reference is pure f32.
    np.testing.assert_allclose(np.asarray(out), np.asarray(ref), rtol=1e-1, atol=1e-1)

    print("KERNEL_OK")
</pallas_src>

<mosaic_0001>
module attributes {stable_mosaic.version = 11 : i64} {
  func.func @_mha_enc_kernel(%arg0: i32, %arg1: i32, %arg2: memref<2x8x128xbf16, #tpu.memory_space<vmem>>, %arg3: memref<2x8x128xbf16, #tpu.memory_space<vmem>>, %arg4: memref<384x128xbf16, #tpu.memory_space<vmem>>, %arg5: memref<2x8x128xf32, #tpu.memory_space<vmem>>, %arg6: memref<2x8x128xbf16, #tpu.memory_space<vmem>>, %arg7: memref<2x8x128xbf16, #tpu.memory_space<vmem>>) attributes {dimension_semantics = [#tpu.dimension_semantics<parallel>, #tpu.dimension_semantics<arbitrary>], iteration_bounds = array<i64: 1, 1>, scalar_prefetch = 0 : i64, scratch_operands = 2 : i64, tpu.core_type = #tpu.core_type<tc>, window_params = [{transform_indices = @transform_0, window_bounds = array<i64: 2, 8, 128>}, {transform_indices = @transform_1, window_bounds = array<i64: 2, 8, 128>}, {pipeline_mode = #tpu.pipeline_mode<synchronous>, transform_indices = @transform_2, window_bounds = array<i64: 384, 128>}, {transform_indices = @transform_3, window_bounds = array<i64: 2, 8, 128>}]} {
    %c0 = arith.constant 0 : index
    %c0_0 = arith.constant 0 : index
    %0 = vector.load %arg4[%c0, %c0_0] : memref<384x128xbf16, #tpu.memory_space<vmem>>, vector<384x128xbf16>
    %1 = vector.extract_strided_slice %0 {offsets = [0, 0], sizes = [128, 128], strides = [1, 1]} : vector<384x128xbf16> to vector<128x128xbf16>
    %2 = vector.extract_strided_slice %0 {offsets = [128, 0], sizes = [256, 128], strides = [1, 1]} : vector<384x128xbf16> to vector<256x128xbf16>
    %c0_i32 = arith.constant 0 : i32
    %3 = arith.cmpi eq, %arg1, %c0_i32 : i32
    %4 = arith.extui %3 : i1 to i32
    %c0_i32_1 = arith.constant 0 : i32
    %5 = arith.cmpi ne, %4, %c0_i32_1 : i32
    scf.if %5 {
      %c0_22 = arith.constant 0 : index
      %c0_23 = arith.constant 0 : index
      %c0_24 = arith.constant 0 : index
      %40 = vector.load %arg2[%c0_22, %c0_23, %c0_24] : memref<2x8x128xbf16, #tpu.memory_space<vmem>>, vector<2x8x128xbf16>
      %41 = vector.shape_cast %40 : vector<2x8x128xbf16> to vector<16x128xbf16>
      %cst_25 = arith.constant dense<0.000000e+00> : vector<16x256xf32>
      %42 = tpu.matmul %41, %2, %cst_25 {dimension_numbers = #tpu.dot_dimension_numbers<[1], [1], [0], [0], [0, 0, 1, 0], [], []>} : vector<16x128xbf16>, vector<256x128xbf16>, vector<16x256xf32> -> vector<16x256xf32>
      %43 = vector.extract_strided_slice %42 {offsets = [0, 0], sizes = [16, 128], strides = [1, 1]} : vector<16x256xf32> to vector<16x128xf32>
      %44 = vector.shape_cast %43 : vector<16x128xf32> to vector<2x8x128xf32>
      %45 = arith.truncf %44 : vector<2x8x128xf32> to vector<2x8x128xbf16>
      %c0_26 = arith.constant 0 : index
      %c0_27 = arith.constant 0 : index
      %c0_28 = arith.constant 0 : index
      %46 = vector.load %arg6[%c0_26, %c0_27, %c0_28] : memref<2x8x128xbf16, #tpu.memory_space<vmem>>, vector<2x8x128xbf16>
      tpu.vector_store %arg6[%c0_26, %c0_27, %c0_28], %45 {strides = array<i32>} : memref<2x8x128xbf16, #tpu.memory_space<vmem>>, vector<2x8x128xbf16>,
      %47 = vector.extract_strided_slice %42 {offsets = [0, 128], sizes = [16, 128], strides = [1, 1]} : vector<16x256xf32> to vector<16x128xf32>
      %48 = vector.shape_cast %47 : vector<16x128xf32> to vector<2x8x128xf32>
      %49 = arith.truncf %48 : vector<2x8x128xf32> to vector<2x8x128xbf16>
      %c0_29 = arith.constant 0 : index
      %c0_30 = arith.constant 0 : index
      %c0_31 = arith.constant 0 : index
      %50 = vector.load %arg7[%c0_29, %c0_30, %c0_31] : memref<2x8x128xbf16, #tpu.memory_space<vmem>>, vector<2x8x128xbf16>
      tpu.vector_store %arg7[%c0_29, %c0_30, %c0_31], %49 {strides = array<i32>} : memref<2x8x128xbf16, #tpu.memory_space<vmem>>, vector<2x8x128xbf16>,
    } else {
    }
    %c0_2 = arith.constant 0 : index
    %c0_3 = arith.constant 0 : index
    %c0_4 = arith.constant 0 : index
    %6 = vector.load %arg3[%c0_2, %c0_3, %c0_4] : memref<2x8x128xbf16, #tpu.memory_space<vmem>>, vector<2x8x128xbf16>
    %7 = vector.shape_cast %6 : vector<2x8x128xbf16> to vector<16x128xbf16>
    %cst = arith.constant dense<0.000000e+00> : vector<16x128xf32>
    %8 = tpu.matmul %7, %1, %cst {dimension_numbers = #tpu.dot_dimension_numbers<[1], [1], [0], [0], [0, 0, 1, 0], [], []>} : vector<16x128xbf16>, vector<128x128xbf16>, vector<16x128xf32> -> vector<16x128xf32>
    %9 = vector.shape_cast %8 : vector<16x128xf32> to vector<2x8x128xf32>
    %10 = arith.truncf %9 : vector<2x8x128xf32> to vector<2x8x128xbf16>
    %c0_5 = arith.constant 0 : index
    %c0_6 = arith.constant 0 : index
    %c0_7 = arith.constant 0 : index
    %11 = vector.load %arg6[%c0_5, %c0_6, %c0_7] : memref<2x8x128xbf16, #tpu.memory_space<vmem>>, vector<2x8x128xbf16>
    %c0_8 = arith.constant 0 : index
    %c0_9 = arith.constant 0 : index
    %c0_10 = arith.constant 0 : index
    %12 = vector.load %arg7[%c0_8, %c0_9, %c0_10] : memref<2x8x128xbf16, #tpu.memory_space<vmem>>, vector<2x8x128xbf16>
    "tpu.trace_start"() <{level = 10 : i32, message = "bqd,bkd->bqk"}> : () -> ()
    %cst_11 = arith.constant dense<0.000000e+00> : vector<2x8x8xf32>
    %13 = tpu.matmul %10, %11, %cst_11 {dimension_numbers = #tpu.dot_dimension_numbers<[2], [2], [1], [1], [0, 0, 0, 1, 1, 1], [0], [0]>} : vector<2x8x128xbf16>, vector<2x8x128xbf16>, vector<2x8x8xf32> -> vector<2x8x8xf32>
    "tpu.trace_stop"() : () -> ()
    %14 = vector.extract_strided_slice %13 {offsets = [0, 0, 0], sizes = [2, 1, 8], strides = [1, 1, 1]} : vector<2x8x8xf32> to vector<2x1x8xf32>
    %cst_12 = arith.constant 0.000000e+00 : f32
    %15 = vector.broadcast %cst_12 : f32 to vector<2x1x8xf32>
    %16 = arith.cmpf one, %14, %15 : vector<2x1x8xf32>
    %17 = arith.extui %16 : vector<2x1x8xi1> to vector<2x1x8xi32>
    %cst_13 = arith.constant dense<0> : vector<2x1xi32>
    %18 = vector.multi_reduction <add>, %17, %cst_13 [2] : vector<2x1x8xi32> to vector<2x1xi32>
    %19 = vector.shape_cast %18 : vector<2x1xi32> to vector<2x1x1xi32>
    %20 = tpu.iota {dimensions = array<i32: 2>} : vector<2x8x8xi32>
    %21 = vector.broadcast %19 : vector<2x1x1xi32> to vector<2x8x8xi32>
    %22 = arith.cmpi sge, %20, %21 : vector<2x8x8xi32>
    %cst_14 = arith.constant 0xFF800000 : f32
    %23 = vector.broadcast %cst_14 : f32 to vector<2x8x8xf32>
    %24 = arith.select %22, %23, %13 : vector<2x8x8xi1>, vector<2x8x8xf32>
    %cst_15 = arith.constant 0.353553385 : f32
    %25 = vector.broadcast %cst_15 : f32 to vector<2x8x8xf32>
    %26 = arith.mulf %24, %25 : vector<2x8x8xf32>
    %cst_16 = arith.constant dense<0xFF800000> : vector<2x8xf32>
    %27 = vector.multi_reduction <maximumf>, %26, %cst_16 [2] : vector<2x8x8xf32> to vector<2x8xf32>
    %28 = vector.shape_cast %27 : vector<2x8xf32> to vector<2x8x1xf32>
    %29 = vector.broadcast %28 : vector<2x8x1xf32> to vector<2x8x8xf32>
    %30 = arith.subf %26, %29 : vector<2x8x8xf32>
    %31 = math.exp %30 : vector<2x8x8xf32>
    %cst_17 = arith.constant dense<0.000000e+00> : vector<2x8xf32>
    %32 = vector.multi_reduction <add>, %31, %cst_17 [2] : vector<2x8x8xf32> to vector<2x8xf32>
    %33 = vector.shape_cast %32 : vector<2x8xf32> to vector<2x8x1xf32>
    %34 = tpu.reciprocal %33 {approx = true} : vector<2x8x1xf32> -> vector<2x8x1xf32>
    %35 = vector.broadcast %34 : vector<2x8x1xf32> to vector<2x8x8xf32>
    %36 = arith.mulf %31, %35 : vector<2x8x8xf32>
    %37 = arith.truncf %36 : vector<2x8x8xf32> to vector<2x8x8xbf16>
    "tpu.trace_start"() <{level = 10 : i32, message = "bqk,bkd->bqd"}> : () -> ()
    %cst_18 = arith.constant dense<0.000000e+00> : vector<2x8x128xf32>
    %38 = tpu.matmul %37, %12, %cst_18 {dimension_numbers = #tpu.dot_dimension_numbers<[2], [1], [1], [2], [0, 0, 0, 1, 1, 2], [0], [0]>} : vector<2x8x8xbf16>, vector<2x8x128xbf16>, vector<2x8x128xf32> -> vector<2x8x128xf32>
    "tpu.trace_stop"() : () -> ()
    %c0_19 = arith.constant 0 : index
    %c0_20 = arith.constant 0 : index
    %c0_21 = arith.constant 0 : index
    %39 = vector.load %arg5[%c0_19, %c0_20, %c0_21] : memref<2x8x128xf32, #tpu.memory_space<vmem>>, vector<2x8x128xf32>
    tpu.vector_store %arg5[%c0_19, %c0_20, %c0_21], %38 {strides = array<i32>} : memref<2x8x128xf32, #tpu.memory_space<vmem>>, vector<2x8x128xf32>,
    return
  }
  func.func @transform_0(%arg0: i32, %arg1: i32) -> (i32, i32, i32) {
    %c0_i32 = arith.constant 0 : i32
    %c0_i32_0 = arith.constant 0 : i32
    %c0_i32_1 = arith.constant 0 : i32
    return %arg0, %c0_i32, %c0_i32_0 : i32, i32, i32
  }
  func.func @transform_1(%arg0: i32, %arg1: i32) -> (i32, i32, i32) {
    %c0_i32 = arith.constant 0 : i32
    %c0_i32_0 = arith.constant 0 : i32
    return %arg0, %arg1, %c0_i32 : i32, i32, i32
  }
  func.func @transform_2(%arg0: i32, %arg1: i32) -> (i32, i32) {
    %c0_i32 = arith.constant 0 : i32
    %c0_i32_0 = arith.constant 0 : i32
    %c0_i32_1 = arith.constant 0 : i32
    return %c0_i32, %c0_i32_0 : i32, i32
  }
  func.func @transform_3(%arg0: i32, %arg1: i32) -> (i32, i32, i32) {
    %c0_i32 = arith.constant 0 : i32
    %c0_i32_0 = arith.constant 0 : i32
    return %arg0, %arg1, %c0_i32 : i32, i32, i32
  }
}

</mosaic_0001>

<llo_original>
// kernel: tpu_custom_call.1
$region0: #{tpu_custom_call.1}
  #allocation0 [shape = 'u32[]', space=smem, size = 0x4, offset = 0x4, fixed_abs, tag = 'smem constant byte address 0x4 - core index']
  #allocation1 [shape = 'u32[144,128]{1,0:T(1,128)}', space=vmem, size = 0x12000, scoped, tag = 'internal scratch']
  #allocation2 [shape = 'bf16[2,8,128]{2,1,0:T(8,128)(2,1)}', space=vmem, size = 0x1000, scoped, tag = 'scratch operand']
  #allocation3 [shape = 'bf16[2,8,128]{2,1,0:T(8,128)(2,1)}', space=vmem, size = 0x1000, scoped, tag = 'scratch operand']
  %s0 = inlined_call_operand.hbm [shape: bf16[2,8,128], index: 0, kind: input, shape index: {}]
  %s1 = inlined_call_operand.hbm [shape: bf16[2,8,128], index: 1, kind: input, shape index: {}]
  %s2 = inlined_call_operand.hbm [shape: bf16[384,128], index: 2, kind: input, shape index: {}]
  %s3 = inlined_call_operand.hbm [shape: f32[2,8,128], index: 3, kind: output, shape index: {}]
  %s4 = sld [smem:[#allocation0]]
  $region38: #{tpu_custom_call.1} parent=0
    _
  %s6 = ssub.s32 1, %s4
  %s7 = scalar_select 0, %s6, %s4
  $region1: #{tpu_custom_call.1} parent=0
    #allocation4 [shape = 'u8[4096]{0}', space=vmem, size = 0x1000, scoped, tag = 'input window, operand 0, single buffered']
    #allocation5 [shape = 's32[1]{0}', space=sflag, size = 0x4, scoped, tag = 'scoped memory for tpu_custom_call.1']
    #allocation6 [shape = 's32[1]{0}', space=sflag, size = 0x4, scoped, tag = 'scoped memory for tpu_custom_call.1']
    #allocation7 [shape = 'u8[4096]{0}', space=vmem, size = 0x1000, scoped, tag = 'input window, operand 1, single buffered']
    #allocation8 [shape = 's32[1]{0}', space=sflag, size = 0x4, scoped, tag = 'scoped memory for tpu_custom_call.1']
    #allocation9 [shape = 'u8[98304]{0}', space=vmem, size = 0x18000, scoped, tag = 'input window, operand 2, single buffered']
    #allocation10 [shape = 'u8[8192]{0}', space=vmem, size = 0x2000, scoped, tag = 'output window, operand 0, single buffered']
    %8 = vsyncpa [#allocation5], 0
    %9 = vsyncpa [#allocation8], 0
    %10 = vsyncpa [#allocation6], 0
    // Predicated region
    $region2: #{tpu_custom_call.1} parent=1 // pred_check
      _
    $region3: #{tpu_custom_call.1} parent=1 // pred_check_branch
      %12 = sbr.rel (0) target = $region5
    $region4: #{tpu_custom_call.1} parent=1 // pred_region
      %s14 = ssub.s32 128, 128
      %15 = vsyncadd [#allocation5], %s14
      %s16 = sshll.u32 [#allocation4], 4
      %s17 = int_to_ptr.vmem [resolvable:$true] %s16
      %22 = dma.hbm_to_vmem [thread:$0]  %s0, 128, %s17, [#allocation5], 64, 64, 4
    $region5: #{tpu_custom_call.1} parent=1 // pred_fallthru
      _
    // Predicated region
    $region6: #{tpu_custom_call.1} parent=1 // pred_check
      _
    $region7: #{tpu_custom_call.1} parent=1 // pred_check_branch
      %24 = sbr.rel (0) target = $region9
    $region8: #{tpu_custom_call.1} parent=1 // pred_region
      %s26 = ssub.s32 128, 128
      %27 = vsyncadd [#allocation8], %s26
      %s28 = sshll.u32 [#allocation7], 4
      %s29 = int_to_ptr.vmem [resolvable:$true] %s28
      %34 = dma.hbm_to_vmem [thread:$0]  %s1, 128, %s29, [#allocation8], 64, 64, 4
    $region9: #{tpu_custom_call.1} parent=1 // pred_fallthru
      _
    // Predicated region
    $region10: #{tpu_custom_call.1} parent=1 // pred_check
      _
    $region11: #{tpu_custom_call.1} parent=1 // pred_check_branch
      %36 = sbr.rel (0) target = $region13
    $region12: #{tpu_custom_call.1} parent=1 // pred_region
      %s38 = ssub.s32 3072, 3072
      %39 = vsyncadd [#allocation8], %s38
      %s40 = sshll.u32 [#allocation9], 4
      %s41 = int_to_ptr.vmem [resolvable:$true] %s40
      %46 = dma.hbm_to_vmem [thread:$0]  %s2, 3072, %s41, [#allocation8], 64, 64, 4
    $region13: #{tpu_custom_call.1} parent=1 // pred_fallthru
      _
    // Predicated region
    $region14: #{tpu_custom_call.1} parent=1 // pred_check
      _
    $region15: #{tpu_custom_call.1} parent=1 // pred_check_branch
      %48 = sbr.rel (0) target = $region17
    $region16: #{tpu_custom_call.1} parent=1 // pred_region
      %49 = dma.done [#allocation5], 128
    $region17: #{tpu_custom_call.1} parent=1 // pred_fallthru
      _
    // Predicated region
    $region18: #{tpu_custom_call.1} parent=1 // pred_check
      _
    $region19: #{tpu_custom_call.1} parent=1 // pred_check_branch
      %51 = sbr.rel (0) target = $region21
    $region20: #{tpu_custom_call.1} parent=1 // pred_region
      %52 = dma.done [#allocation8], 128
    $region21: #{tpu_custom_call.1} parent=1 // pred_fallthru
      _
    // Predicated region
    $region22: #{tpu_custom_call.1} parent=1 // pred_check
      _
    $region23: #{tpu_custom_call.1} parent=1 // pred_check_branch
      %54 = sbr.rel (0) target = $region25
    $region24: #{tpu_custom_call.1} parent=1 // pred_region
      %55 = dma.done [#allocation8], 3072
    $region25: #{tpu_custom_call.1} parent=1 // pred_fallthru
      _
    %v57 = vld [vmem:[#allocation9] sm:$0xf]
    %v58 = vld [vmem:[#allocation9 + $0x4] sm:$0xf]
    %v59 = vld [vmem:[#allocation9 + $0x8] sm:$0xf]
    %v60 = vld [vmem:[#allocation9 + $0xc] sm:$0xf]
    %v61 = vld [vmem:[#allocation9 + $0x10] sm:$0xf]
    %v62 = vld [vmem:[#allocation9 + $0x14] sm:$0xf]
    %v63 = vld [vmem:[#allocation9 + $0x18] sm:$0xf]
    %v64 = vld [vmem:[#allocation9 + $0x1c] sm:$0xf]
    %v65 = vld [vmem:[#allocation9 + $0x20] sm:$0xf]
    %v66 = vld [vmem:[#allocation9 + $0x24] sm:$0xf]
    %v67 = vld [vmem:[#allocation9 + $0x28] sm:$0xf]
    %v68 = vld [vmem:[#allocation9 + $0x2c] sm:$0xf]
    %v69 = vld [vmem:[#allocation9 + $0x30] sm:$0xf]
    %v70 = vld [vmem:[#allocation9 + $0x34] sm:$0xf]
    %v71 = vld [vmem:[#allocation9 + $0x38] sm:$0xf]
    %v72 = vld [vmem:[#allocation9 + $0x3c] sm:$0xf]
    %v73 = vld [vmem:[#allocation9 + $0x40] sm:$0xf]
    %v74 = vld [vmem:[#allocation9 + $0x44] sm:$0xf]
    %v75 = vld [vmem:[#allocation9 + $0x48] sm:$0xf]
    %v76 = vld [vmem:[#allocation9 + $0x4c] sm:$0xf]
    %v77 = vld [vmem:[#allocation9 + $0x50] sm:$0xf]
    %v78 = vld [vmem:[#allocation9 + $0x54] sm:$0xf]
    %v79 = vld [vmem:[#allocation9 + $0x58] sm:$0xf]
    %v80 = vld [vmem:[#allocation9 + $0x5c] sm:$0xf]
    %v81 = vld [vmem:[#allocation9 + $0x60] sm:$0xf]
    %v82 = vld [vmem:[#allocation9 + $0x64] sm:$0xf]
    %v83 = vld [vmem:[#allocation9 + $0x68] sm:$0xf]
    %v84 = vld [vmem:[#allocation9 + $0x6c] sm:$0xf]
    %v85 = vld [vmem:[#allocation9 + $0x70] sm:$0xf]
    %v86 = vld [vmem:[#allocation9 + $0x74] sm:$0xf]
    %v87 = vld [vmem:[#allocation9 + $0x78] sm:$0xf]
    %v88 = vld [vmem:[#allocation9 + $0x7c] sm:$0xf]
    %v89 = vld [vmem:[#allocation9 + $0x80] sm:$0xf]
    %v90 = vld [vmem:[#allocation9 + $0x84] sm:$0xf]
    %v91 = vld [vmem:[#allocation9 + $0x88] sm:$0xf]
    %v92 = vld [vmem:[#allocation9 + $0x8c] sm:$0xf]
    %v93 = vld [vmem:[#allocation9 + $0x90] sm:$0xf]
    %v94 = vld [vmem:[#allocation9 + $0x94] sm:$0xf]
    %v95 = vld [vmem:[#allocation9 + $0x98] sm:$0xf]
    %v96 = vld [vmem:[#allocation9 + $0x9c] sm:$0xf]
    %v97 = vld [vmem:[#allocation9 + $0xa0] sm:$0xf]
    %v98 = vld [vmem:[#allocation9 + $0xa4] sm:$0xf]
    %v99 = vld [vmem:[#allocation9 + $0xa8] sm:$0xf]
    %v100 = vld [vmem:[#allocation9 + $0xac] sm:$0xf]
    %v101 = vld [vmem:[#allocation9 + $0xb0] sm:$0xf]
    %v102 = vld [vmem:[#allocation9 + $0xb4] sm:$0xf]
    %v103 = vld [vmem:[#allocation9 + $0xb8] sm:$0xf]
    %v104 = vld [vmem:[#allocation9 + $0xbc] sm:$0xf]
    %p105 = scmp.eq.s32.totalorder 0, 0
    // Predicated region
    $region26: #{tpu_custom_call.1} parent=1 // pred_check
      %p106 = pneg %p105
    $region27: #{tpu_custom_call.1} parent=1 // pred_check_branch
      %108 = sbr.rel (%p106) target = $region29
    $region28: #{tpu_custom_call.1} parent=1 // pred_region
      %v109 = vld [vmem:[#allocation4] sm:$0xf]
      %v110 = vld [vmem:[#allocation4 + $0x4] sm:$0xf]
      %v113 = vunpack.c.l.b16 %v109
      %v114 = vunpack.c.l.b16 %v110
      %v115 = vpack.c.b16 %v114, %v113
      %v149 = vunpack.c.l.b16 %v73
      %v150 = vunpack.c.l.b16 %v74
      %v151 = vunpack.c.l.b16 %v75
      %v152 = vunpack.c.l.b16 %v76
      %v153 = vunpack.c.l.b16 %v77
      %v154 = vunpack.c.l.b16 %v78
      %v155 = vunpack.c.l.b16 %v79
      %v156 = vunpack.c.l.b16 %v80
      %v157 = vunpack.c.l.b16 %v81
      %v158 = vunpack.c.l.b16 %v82
      %v159 = vunpack.c.l.b16 %v83
      %v160 = vunpack.c.l.b16 %v84
      %v161 = vunpack.c.l.b16 %v85
      %v162 = vunpack.c.l.b16 %v86
      %v163 = vunpack.c.l.b16 %v87
      %v164 = vunpack.c.l.b16 %v88
      %v165 = vunpack.c.l.b16 %v89
      %v166 = vunpack.c.l.b16 %v90
      %v167 = vunpack.c.l.b16 %v91
      %v168 = vunpack.c.l.b16 %v92
      %v169 = vunpack.c.l.b16 %v93
      %v170 = vunpack.c.l.b16 %v94
      %v171 = vunpack.c.l.b16 %v95
      %v172 = vunpack.c.l.b16 %v96
      %v173 = vunpack.c.l.b16 %v97
      %v174 = vunpack.c.l.b16 %v98
      %v175 = vunpack.c.l.b16 %v99
      %v176 = vunpack.c.l.b16 %v100
      %v177 = vunpack.c.l.b16 %v101
      %v178 = vunpack.c.l.b16 %v102
      %v179 = vunpack.c.l.b16 %v103
      %v180 = vunpack.c.l.b16 %v104
      %v181 = vpack.c.b16 %v150, %v149
      %v182 = vpack.c.b16 %v152, %v151
      %v183 = vpack.c.b16 %v154, %v153
      %v184 = vpack.c.b16 %v156, %v155
      %v185 = vpack.c.b16 %v158, %v157
      %v186 = vpack.c.b16 %v160, %v159
      %v187 = vpack.c.b16 %v162, %v161
      %v188 = vpack.c.b16 %v164, %v163
      %v189 = vpack.c.b16 %v166, %v165
      %v190 = vpack.c.b16 %v168, %v167
      %v191 = vpack.c.b16 %v170, %v169
      %v192 = vpack.c.b16 %v172, %v171
      %v193 = vpack.c.b16 %v174, %v173
      %v194 = vpack.c.b16 %v176, %v175
      %v195 = vpack.c.b16 %v178, %v177
      %v196 = vpack.c.b16 %v180, %v179
      %213 = vmatprep.subr.bf16.mxu0 0
      %214 = vmatpush1.bf16.xpose.msra.mxu0 %v181
      %215 = vmatprep.subr.bf16.mxu0 0
      %216 = vmatpush1.bf16.xpose.msra.mxu0 %v182
      %217 = vmatprep.subr.bf16.mxu0 0
      %218 = vmatpush1.bf16.xpose.msra.mxu0 %v183
      %219 = vmatprep.subr.bf16.mxu0 0
      %220 = vmatpush1.bf16.xpose.msra.mxu0 %v184
      %221 = vmatprep.subr.bf16.mxu0 0
      %222 = vmatpush1.bf16.xpose.msra.mxu0 %v185
      %223 = vmatprep.subr.bf16.mxu0 0
      %224 = vmatpush1.bf16.xpose.msra.mxu0 %v186
      %225 = vmatprep.subr.bf16.mxu0 0
      %226 = vmatpush1.bf16.xpose.msra.mxu0 %v187
      %227 = vmatprep.subr.bf16.mxu0 0
      %228 = vmatpush1.bf16.xpose.msra.mxu0 %v188
      %229 = vmatprep.subr.bf16.mxu0 0
      %230 = vmatpush1.bf16.xpose.msra.mxu0 %v189
      %231 = vmatprep.subr.bf16.mxu0 0
      %232 = vmatpush1.bf16.xpose.msra.mxu0 %v190
      %233 = vmatprep.subr.bf16.mxu0 0
      %234 = vmatpush1.bf16.xpose.msra.mxu0 %v191
      %235 = vmatprep.subr.bf16.mxu0 0
      %236 = vmatpush1.bf16.xpose.msra.mxu0 %v192
      %237 = vmatprep.subr.bf16.mxu0 0
      %238 = vmatpush1.bf16.xpose.msra.mxu0 %v193
      %239 = vmatprep.subr.bf16.mxu0 0
      %240 = vmatpush1.bf16.xpose.msra.mxu0 %v194
      %241 = vmatprep.subr.bf16.mxu0 0
      %242 = vmatpush1.bf16.xpose.msra.mxu0 %v195
      %243 = vmatprep.subr.bf16.mxu0 0
      %244 = vmatpush1.bf16.xpose.msra.mxu0 %v196
      %245 = vmatprep.mubr.bf16.mxu0 0
      %246 = vmatmul.mubr.bf16.gmra.mrb[0].mxu0 %v115
      %v247 = vpop.f32.mrb[0].mxu0
      %v248 = vadd.f32 0.0, %v247
      %v249 = vpop.f32.mrb[0].mxu0
      %v250 = vadd.f32 0.0, %v249
      %v251 = vpop.f32.mrb[0].mxu0
      %v252 = vadd.f32 0.0, %v251
      %v253 = vpop.f32.mrb[0].mxu0
      %v254 = vadd.f32 0.0, %v253
      %255 = vdwg.mxu0
      %v256 = vpack.c.bf16 %v248, %v248
      %v257 = vpack.c.bf16 %v252, %v252
      %258 = vst [vmem:[#allocation2] sm:$0xf] %v256
      %259 = vst [vmem:[#allocation2 + $0x4] sm:$0xf] %v257
      %v260 = vpack.c.bf16 %v250, %v250
      %v261 = vpack.c.bf16 %v254, %v254
      %262 = vst [vmem:[#allocation3] sm:$0xf] %v260
      %263 = vst [vmem:[#allocation3 + $0x4] sm:$0xf] %v261
    $region29: #{tpu_custom_call.1} parent=1 // pred_fallthru
      _
    %v264 = vld [vmem:[#allocation7] sm:$0xf]
    %v265 = vld [vmem:[#allocation7 + $0x4] sm:$0xf]
    %v268 = vunpack.c.l.b16 %v264
    %v269 = vunpack.c.l.b16 %v265
    %v270 = vpack.c.b16 %v269, %v268
    %v288 = vunpack.c.l.b16 %v57
    %v289 = vunpack.c.l.b16 %v58
    %v290 = vunpack.c.l.b16 %v59
    %v291 = vunpack.c.l.b16 %v60
    %v292 = vunpack.c.l.b16 %v61
    %v293 = vunpack.c.l.b16 %v62
    %v294 = vunpack.c.l.b16 %v63
    %v295 = vunpack.c.l.b16 %v64
    %v296 = vunpack.c.l.b16 %v65
    %v297 = vunpack.c.l.b16 %v66
    %v298 = vunpack.c.l.b16 %v67
    %v299 = vunpack.c.l.b16 %v68
    %v300 = vunpack.c.l.b16 %v69
    %v301 = vunpack.c.l.b16 %v70
    %v302 = vunpack.c.l.b16 %v71
    %v303 = vunpack.c.l.b16 %v72
    %v304 = vpack.c.b16 %v289, %v288
    %v305 = vpack.c.b16 %v291, %v290
    %v306 = vpack.c.b16 %v293, %v292
    %v307 = vpack.c.b16 %v295, %v294
    %v308 = vpack.c.b16 %v297, %v296
    %v309 = vpack.c.b16 %v299, %v298
    %v310 = vpack.c.b16 %v301, %v300
    %v311 = vpack.c.b16 %v303, %v302
    %320 = vmatprep.subr.bf16.mxu0 0
    %321 = vmatpush1.bf16.xpose.msra.mxu0 %v304
    %322 = vmatprep.subr.bf16.mxu0 0
    %323 = vmatpush1.bf16.xpose.msra.mxu0 %v305
    %324 = vmatprep.subr.bf16.mxu0 0
    %325 = vmatpush1.bf16.xpose.msra.mxu0 %v306
    %326 = vmatprep.subr.bf16.mxu0 0
    %327 = vmatpush1.bf16.xpose.msra.mxu0 %v307
    %328 = vmatprep.subr.bf16.mxu0 0
    %329 = vmatpush1.bf16.xpose.msra.mxu0 %v308
    %330 = vmatprep.subr.bf16.mxu0 0
    %331 = vmatpush1.bf16.xpose.msra.mxu0 %v309
    %332 = vmatprep.subr.bf16.mxu0 0
    %333 = vmatpush1.bf16.xpose.msra.mxu0 %v310
    %334 = vmatprep.subr.bf16.mxu0 0
    %335 = vmatpush1.bf16.xpose.msra.mxu0 %v311
    %336 = vmatprep.subr.bf16.mxu0 0
    %337 = vmatpush1.bf16.xpose.msra.mxu0 0
    %338 = vmatprep.subr.bf16.mxu0 0
    %339 = vmatpush1.bf16.xpose.msra.mxu0 0
    %340 = vmatprep.subr.bf16.mxu0 0
    %341 = vmatpush1.bf16.xpose.msra.mxu0 0
    %342 = vmatprep.subr.bf16.mxu0 0
    %343 = vmatpush1.bf16.xpose.msra.mxu0 0
    %344 = vmatprep.subr.bf16.mxu0 0
    %345 = vmatpush1.bf16.xpose.msra.mxu0 0
    %346 = vmatprep.subr.bf16.mxu0 0
    %347 = vmatpush1.bf16.xpose.msra.mxu0 0
    %348 = vmatprep.subr.bf16.mxu0 0
    %349 = vmatpush1.bf16.xpose.msra.mxu0 0
    %350 = vmatprep.subr.bf16.mxu0 0
    %351 = vmatpush1.bf16.xpose.msra.mxu0 0
    %352 = vmatprep.mubr.bf16.mxu0 0
    %353 = vmatmul.mubr.bf16.gmra.mrb[0].mxu0 %v270
    %v354 = vpop.f32.mrb[0].mxu0
    %v355 = vadd.f32 0.0, %v354
    %v356 = vpop.f32.mrb[0].mxu0
    %v357 = vpop.f32.mrb[0].mxu0
    %v358 = vadd.f32 0.0, %v357
    %v359 = vpop.f32.mrb[0].mxu0
    %360 = vdwg.mxu0
    %v361 = vpack.c.bf16 %v355, %v355
    %v362 = vpack.c.bf16 %v358, %v358
    %v363 = vld [vmem:[#allocation2] sm:$0xf]
    %v364 = vld [vmem:[#allocation2 + $0x4] sm:$0xf]
    %v365 = vld [vmem:[#allocation3] sm:$0xf]
    %v366 = vld [vmem:[#allocation3 + $0x4] sm:$0xf]
    %367 = vmatprep.subr.bf16.mxu0 0
    %368 = vmatpush1.bf16.xpose.msra.mxu0 %v363
    %369 = vmatprep.subr.bf16.mxu0 0
    %370 = vmatpush1.bf16.xpose.msra.mxu0 0
    %371 = vmatprep.subr.bf16.mxu0 0
    %372 = vmatpush1.bf16.xpose.msra.mxu0 0
    %373 = vmatprep.subr.bf16.mxu0 0
    %374 = vmatpush1.bf16.xpose.msra.mxu0 0
    %375 = vmatprep.subr.bf16.mxu0 0
    %376 = vmatpush1.bf16.xpose.msra.mxu0 0
    %377 = vmatprep.subr.bf16.mxu0 0
    %378 = vmatpush1.bf16.xpose.msra.mxu0 0
    %379 = vmatprep.subr.bf16.mxu0 0
    %380 = vmatpush1.bf16.xpose.msra.mxu0 0
    %381 = vmatprep.subr.bf16.mxu0 0
    %382 = vmatpush1.bf16.xpose.msra.mxu0 0
    %383 = vmatprep.subr.bf16.mxu0 0
    %384 = vmatpush1.bf16.xpose.msra.mxu0 0
    %385 = vmatprep.subr.bf16.mxu0 0
    %386 = vmatpush1.bf16.xpose.msra.mxu0 0
    %387 = vmatprep.subr.bf16.mxu0 0
    %388 = vmatpush1.bf16.xpose.msra.mxu0 0
    %389 = vmatprep.subr.bf16.mxu0 0
    %390 = vmatpush1.bf16.xpose.msra.mxu0 0
    %391 = vmatprep.subr.bf16.mxu0 0
    %392 = vmatpush1.bf16.xpose.msra.mxu0 0
    %393 = vmatprep.subr.bf16.mxu0 0
    %394 = vmatpush1.bf16.xpose.msra.mxu0 0
    %395 = vmatprep.subr.bf16.mxu0 0
    %396 = vmatpush1.bf16.xpose.msra.mxu0 0
    %397 = vmatprep.subr.bf16.mxu0 0
    %398 = vmatpush1.bf16.xpose.msra.mxu0 0
    %399 = vmatprep.mubr.bf16.mxu0 0
    %400 = vmatmul.mubr.bf16.gmra.mrb[0].mxu0 %v361
    %v401 = vpop.f32.mrb[0].mxu0
    %v402 = vadd.f32 0.0, %v401
    %v403 = vpop.f32.mrb[0].mxu0
    %v404 = vpop.f32.mrb[0].mxu0
    %v405 = vpop.f32.mrb[0].mxu0
    %406 = vdwg.mxu0
    %407 = vmatprep.subr.bf16.mxu0 0
    %408 = vmatpush1.bf16.xpose.msra.mxu0 %v364
    %409 = vmatprep.subr.bf16.mxu0 0
    %410 = vmatpush1.bf16.xpose.msra.mxu0 0
    %411 = vmatprep.subr.bf16.mxu0 0
    %412 = vmatpush1.bf16.xpose.msra.mxu0 0
    %413 = vmatprep.subr.bf16.mxu0 0
    %414 = vmatpush1.bf16.xpose.msra.mxu0 0
    %415 = vmatprep.subr.bf16.mxu0 0
    %416 = vmatpush1.bf16.xpose.msra.mxu0 0
    %417 = vmatprep.subr.bf16.mxu0 0
    %418 = vmatpush1.bf16.xpose.msra.mxu0 0
    %419 = vmatprep.subr.bf16.mxu0 0
    %420 = vmatpush1.bf16.xpose.msra.mxu0 0
    %421 = vmatprep.subr.bf16.mxu0 0
    %422 = vmatpush1.bf16.xpose.msra.mxu0 0
    %423 = vmatprep.subr.bf16.mxu0 0
    %424 = vmatpush1.bf16.xpose.msra.mxu0 0
    %425 = vmatprep.subr.bf16.mxu0 0
    %426 = vmatpush1.bf16.xpose.msra.mxu0 0
    %427 = vmatprep.subr.bf16.mxu0 0
    %428 = vmatpush1.bf16.xpose.msra.mxu0 0
    %429 = vmatprep.subr.bf16.mxu0 0
    %430 = vmatpush1.bf16.xpose.msra.mxu0 0
    %431 = vmatprep.subr.bf16.mxu0 0
    %432 = vmatpush1.bf16.xpose.msra.mxu0 0
    %433 = vmatprep.subr.bf16.mxu0 0
    %434 = vmatpush1.bf16.xpose.msra.mxu0 0
    %435 = vmatprep.subr.bf16.mxu0 0
    %436 = vmatpush1.bf16.xpose.msra.mxu0 0
    %437 = vmatprep.subr.bf16.mxu0 0
    %438 = vmatpush1.bf16.xpose.msra.mxu0 0
    %439 = vmatprep.mubr.bf16.mxu0 0
    %440 = vmatmul.mubr.bf16.gmra.mrb[0].mxu0 %v362
    %v441 = vpop.f32.mrb[0].mxu0
    %v442 = vadd.f32 0.0, %v441
    %v443 = vpop.f32.mrb[0].mxu0
    %v444 = vpop.f32.mrb[0].mxu0
    %v445 = vpop.f32.mrb[0].mxu0
    %446 = vdwg.mxu0
    %vm447 = vcmp.ne.f32.partialorder %v402, 0.0
    %vm448 = vcmp.ne.f32.partialorder %v442, 0.0
    %v449 = vsel %vm447, 1, 0
    %v450 = vsel %vm448, 1, 0
    %vm451 = vcmask 57344
    %v452 = vsel %vm451, %v449, 0
    %v453 = vand.u32 %v452, 65535
    %v454 = vshrl.u32 %v452, 16
    %v455 = vcvt.s32.f32 %v453
    %v456 = vcvt.s32.f32 %v454
    %457 = vadd.xlane.f32.xlu0 %v455
    %v458 = vpop.xlane.xlu0 %457
    %459 = vadd.xlane.f32.xlu0 %v456
    %v460 = vpop.xlane.xlu0 %459
    %v461 = vcvt.f32.s32 %v458
    %v462 = vcvt.f32.s32 %v460
    %v463 = vshll.u32 %v462, 16
    %v464 = vadd.s32 %v463, %v461
    %v465 = vsel %vm451, %v450, 0
    %v466 = vand.u32 %v465, 65535
    %v467 = vshrl.u32 %v465, 16
    %v468 = vcvt.s32.f32 %v466
    %v469 = vcvt.s32.f32 %v467
    %470 = vadd.xlane.f32.xlu0 %v468
    %v471 = vpop.xlane.xlu0 %470
    %472 = vadd.xlane.f32.xlu0 %v469
    %v473 = vpop.xlane.xlu0 %472
    %v474 = vcvt.f32.s32 %v471
    %v475 = vcvt.f32.s32 %v473
    %v476 = vshll.u32 %v475, 16
    %v477 = vadd.s32 %v476, %v474
    %v478 = vlaneseq
    %v479 = vand.u32 %v478, 127
    %v480 = vlaneseq
    %v481 = vshrl.u32 %v480, 7
    %v482 = vsub.s32 0, %v481
    %v483 = vrot.slane %v464, %v482
    %v484 = vlaneseq
    %v485 = vshrl.u32 %v484, 7
    %v486 = vsub.s32 0, %v485
    %v487 = vrot.slane %v477, %v486
    %vm488 = vcmp.ge.s32.totalorder %v479, %v483
    %vm489 = vcmp.ge.s32.totalorder %v479, %v487
    %v490 = vsel %vm488, -inf, %v402
    %v491 = vsel %vm489, -inf, %v442
    %v492 = vmul.f32 %v490, 0.35355338
    %v493 = vmul.f32 %v491, 0.35355338
    %vm494 = vcmask 64512
    %v495 = vsel %vm494, %v492, -inf
    %496 = vmax.xlane.f32.xlu0 %v495
    %v497 = vpop.xlane.xlu0 %496
    %v498 = vsel %vm494, %v493, -inf
    %499 = vmax.xlane.f32.xlu0 %v498
    %v500 = vpop.xlane.xlu0 %499
    %v501 = vsub.f32 %v492, %v497
    %v502 = vsub.f32 %v493, %v500
    %v503 = vmul.f32 %v501, 1.442695
    %v504 = vpow.pop %v503
    %v505 = vmul.f32 %v502, 1.442695
    %v506 = vpow.pop %v505
    %v507 = vsel %vm494, %v504, 0.0
    %508 = vadd.xlane.f32.xlu0 %v507
    %v509 = vpop.xlane.xlu0 %508
    %v510 = vsel %vm494, %v506, 0.0
    %511 = vadd.xlane.f32.xlu0 %v510
    %v512 = vpop.xlane.xlu0 %511
    %v513 = vrcp.pop %v509
    %v514 = vrcp.pop %v512
    %v515 = vmul.f32 %v504, %v513
    %v516 = vmul.f32 %v506, %v514
    %v517 = vpack.c.bf16 %v515, %v515
    %v518 = vpack.c.bf16 %v516, %v516
    %v520 = vsel %vm494, %v517, 0
    %vm522 = vcmask 1043456
    %v524 = vsel %vm522, %v365, 0
    %526 = vmatprep.subr.bf16.mxu0 0
    %527 = vmatpush1.bf16.msra.mxu0 %v524
    %528 = vmatprep.subr.bf16.mxu0 0
    %529 = vmatpush1.bf16.msra.mxu0 0
    %530 = vmatprep.subr.bf16.mxu0 0
    %531 = vmatpush1.bf16.msra.mxu0 0
    %532 = vmatprep.subr.bf16.mxu0 0
    %533 = vmatpush1.bf16.msra.mxu0 0
    %534 = vmatprep.subr.bf16.mxu0 0
    %535 = vmatpush1.bf16.msra.mxu0 0
    %536 = vmatprep.subr.bf16.mxu0 0
    %537 = vmatpush1.bf16.msra.mxu0 0
    %538 = vmatprep.subr.bf16.mxu0 0
    %539 = vmatpush1.bf16.msra.mxu0 0
    %540 = vmatprep.subr.bf16.mxu0 0
    %541 = vmatpush1.bf16.msra.mxu0 0
    %542 = vmatprep.subr.bf16.mxu0 0
    %543 = vmatpush1.bf16.msra.mxu0 0
    %544 = vmatprep.subr.bf16.mxu0 0
    %545 = vmatpush1.bf16.msra.mxu0 0
    %546 = vmatprep.subr.bf16.mxu0 0
    %547 = vmatpush1.bf16.msra.mxu0 0
    %548 = vmatprep.subr.bf16.mxu0 0
    %549 = vmatpush1.bf16.msra.mxu0 0
    %550 = vmatprep.subr.bf16.mxu0 0
    %551 = vmatpush1.bf16.msra.mxu0 0
    %552 = vmatprep.subr.bf16.mxu0 0
    %553 = vmatpush1.bf16.msra.mxu0 0
    %554 = vmatprep.subr.bf16.mxu0 0
    %555 = vmatpush1.bf16.msra.mxu0 0
    %556 = vmatprep.subr.bf16.mxu0 0
    %557 = vmatpush1.bf16.msra.mxu0 0
    %558 = vmatprep.mubr.bf16.mxu0 0
    %559 = vmatmul.mubr.bf16.gmra.mrb[0].mxu0 %v520
    %v560 = vpop.f32.mrb[0].mxu0
    %v561 = vadd.f32 0.0, %v560
    %v562 = vpop.f32.mrb[0].mxu0
    %v563 = vpop.f32.mrb[0].mxu0
    %v564 = vpop.f32.mrb[0].mxu0
    %565 = vdwg.mxu0
    %v567 = vsel %vm494, %v518, 0
    %v570 = vsel %vm522, %v366, 0
    %572 = vmatprep.subr.bf16.mxu0 0
    %573 = vmatpush1.bf16.msra.mxu0 %v570
    %574 = vmatprep.subr.bf16.mxu0 0
    %575 = vmatpush1.bf16.msra.mxu0 0
    %576 = vmatprep.subr.bf16.mxu0 0
    %577 = vmatpush1.bf16.msra.mxu0 0
    %578 = vmatprep.subr.bf16.mxu0 0
    %579 = vmatpush1.bf16.msra.mxu0 0
    %580 = vmatprep.subr.bf16.mxu0 0
    %581 = vmatpush1.bf16.msra.mxu0 0
    %582 = vmatprep.subr.bf16.mxu0 0
    %583 = vmatpush1.bf16.msra.mxu0 0
    %584 = vmatprep.subr.bf16.mxu0 0
    %585 = vmatpush1.bf16.msra.mxu0 0
    %586 = vmatprep.subr.bf16.mxu0 0
    %587 = vmatpush1.bf16.msra.mxu0 0
    %588 = vmatprep.subr.bf16.mxu0 0
    %589 = vmatpush1.bf16.msra.mxu0 0
    %590 = vmatprep.subr.bf16.mxu0 0
    %591 = vmatpush1.bf16.msra.mxu0 0
    %592 = vmatprep.subr.bf16.mxu0 0
    %593 = vmatpush1.bf16.msra.mxu0 0
    %594 = vmatprep.subr.bf16.mxu0 0
    %595 = vmatpush1.bf16.msra.mxu0 0
    %596 = vmatprep.subr.bf16.mxu0 0
    %597 = vmatpush1.bf16.msra.mxu0 0
    %598 = vmatprep.subr.bf16.mxu0 0
    %599 = vmatpush1.bf16.msra.mxu0 0
    %600 = vmatprep.subr.bf16.mxu0 0
    %601 = vmatpush1.bf16.msra.mxu0 0
    %602 = vmatprep.subr.bf16.mxu0 0
    %603 = vmatpush1.bf16.msra.mxu0 0
    %604 = vmatprep.mubr.bf16.mxu0 0
    %605 = vmatmul.mubr.bf16.gmra.mrb[0].mxu0 %v567
    %v606 = vpop.f32.mrb[0].mxu0
    %v607 = vadd.f32 0.0, %v606
    %v608 = vpop.f32.mrb[0].mxu0
    %v609 = vpop.f32.mrb[0].mxu0
    %v610 = vpop.f32.mrb[0].mxu0
    %611 = vdwg.mxu0
    %612 = vst [vmem:[#allocation10] sm:$0xff] %v561
    %613 = vst [vmem:[#allocation10 + $0x8] sm:$0xff] %v607
    // Predicated region
    $region30: #{tpu_custom_call.1} parent=1 // pred_check
      _
    $region31: #{tpu_custom_call.1} parent=1 // pred_check_branch
      %615 = sbr.rel (0) target = $region33
    $region32: #{tpu_custom_call.1} parent=1 // pred_region
      %s617 = ssub.s32 256, 256
      %618 = vsyncadd [#allocation6], %s617
      %s619 = sshll.u32 [#allocation10], 4
      %s620 = int_to_ptr.vmem [resolvable:$true] %s619
      %625 = dma.vmem_to_hbm [thread:$0]  %s620, 256, %s3, [#allocation6], 128, 128, 8
    $region33: #{tpu_custom_call.1} parent=1 // pred_fallthru
      _
    // Predicated region
    $region34: #{tpu_custom_call.1} parent=1 // pred_check
      _
    $region35: #{tpu_custom_call.1} parent=1 // pred_check_branch
      %627 = sbr.rel (0) target = $region37
    $region36: #{tpu_custom_call.1} parent=1 // pred_region
      %628 = dma.done [#allocation6], 256
    $region37: #{tpu_custom_call.1} parent=1 // pred_fallthru
      _
    %629 = vsyncpa [#allocation5], 1
    %630 = vsyncpa [#allocation8], 1
    %631 = vsyncpa [#allocation6], 1

</llo_original>
